<compile_context>
chip_gen: v6e
topology: v6e:2x2x1
jax: 0.10.0
libtpu: 0.0.40
codegen_flags: <defaults>
</compile_context>

<pallas_src>
import functools

import jax
import jax.numpy as jnp
from jax.experimental import pallas as pl
from jax.experimental.pallas import tpu as pltpu

SUBLANE = 8


def _round_up(n, m):
    return ((n + m - 1) // m) * m


def mlp_kernel(x_ref, w1_ref, b1_ref, w2_ref, b2_ref, w3_ref, b3_ref, o_ref):
    # x tile: (tm, input_size) f32 straight from HBM; cast to the MXU dtype
    # in-kernel (VPU cast, no extra HBM pass).
    x = x_ref[...].astype(w1_ref.dtype)

    # Layer 1: Linear + ReLU (MXU matmul, f32 accumulate, f32 epilogue).
    h1 = jnp.dot(x, w1_ref[...], preferred_element_type=jnp.float32) + b1_ref[...]
    h1 = jnp.maximum(h1, 0.0)
    # Dropout(0.3): identity at inference.
    h1 = h1.astype(w2_ref.dtype)

    # Layer 2: Linear + ReLU.
    h2 = jnp.dot(h1, w2_ref[...], preferred_element_type=jnp.float32) + b2_ref[...]
    h2 = jnp.maximum(h2, 0.0)
    # Dropout(0.3): identity at inference.
    h2 = h2.astype(w3_ref.dtype)

    # Layer 3: Linear (logits), stored lane-tight at num_classes width.
    out = jnp.dot(h2, w3_ref[...], preferred_element_type=jnp.float32) + b3_ref[...]
    o_ref[...] = out.astype(o_ref.dtype)


def prepare_params(params, mxu_dtype=jnp.bfloat16):
    """One-time weight cast (call once, outside the per-step forward)."""
    return {
        "w1": params["w1"].astype(mxu_dtype),
        "w2": params["w2"].astype(mxu_dtype),
        "w3": params["w3"].astype(mxu_dtype),
        "b1": params["b1"].astype(jnp.float32).reshape(1, -1),
        "b2": params["b2"].astype(jnp.float32).reshape(1, -1),
        "b3": params["b3"].astype(jnp.float32).reshape(1, -1),
    }


@functools.partial(jax.jit, static_argnames=("block_batch",))
def emotion_classifier_forward(x, params, *, block_batch=2048):
    """x: (batch, input_size) float32.  params: output of prepare_params().

    Weights are (in, out) bf16; biases are (1, out) f32.  Returns
    (batch, num_classes) float32 logits.
    """
    w1, b1 = params["w1"], params["b1"]
    w2, b2 = params["w2"], params["b2"]
    w3, b3 = params["w3"], params["b3"]

    batch, input_size = x.shape
    hidden = w1.shape[1]
    hidden2 = w2.shape[1]
    num_classes = w3.shape[1]

    # Batch tiling: pad only to a sublane multiple, not to a multiple of tm.
    batch_p = _round_up(batch, SUBLANE)
    tm = min(block_batch, batch_p)
    # Keep >= 2 grid tiles when possible so both v7x TensorCores get work
    # (cheap on single-TC v5e/v6e: one extra ~0.35 us grid step).
    if batch_p // tm < 2 and batch_p >= 2 * SUBLANE:
        tm = _round_up(pl.cdiv(batch_p, 2), SUBLANE)
    grid_m = pl.cdiv(batch_p, tm)
    batch_pad = grid_m * tm

    xp = x if batch_pad == batch else jnp.pad(x, ((0, batch_pad - batch), (0, 0)))

    const = lambda i: (0, 0)  # weights/biases: VMEM-resident across the grid

    out_padded = pl.pallas_call(
        mlp_kernel,
        out_shape=jax.ShapeDtypeStruct((batch_pad, num_classes), jnp.float32),
        grid_spec=pltpu.PrefetchScalarGridSpec(
            num_scalar_prefetch=0,
            grid=(grid_m,),
            in_specs=[
                pl.BlockSpec((tm, input_size), lambda i: (i, 0)),  # x tile (raw f32)
                pl.BlockSpec((input_size, hidden), const),         # w1
                pl.BlockSpec((1, hidden), const),                  # b1
                pl.BlockSpec((hidden, hidden2), const),            # w2
                pl.BlockSpec((1, hidden2), const),                 # b2
                pl.BlockSpec((hidden2, num_classes), const),       # w3
                pl.BlockSpec((1, num_classes), const),             # b3
            ],
            out_specs=pl.BlockSpec((tm, num_classes), lambda i: (i, 0)),
        ),
        compiler_params=pltpu.CompilerParams(
            dimension_semantics=("parallel",),  # shard batch tiles across TCs
        ),
    )(xp, w1, b1, w2, b2, w3, b3)

    if batch_pad == batch:
        return out_padded
    return out_padded[:batch]


def init_params(key, input_size, hidden_size, num_classes):
    """Deterministic synthetic parameters (same shapes as the PyTorch module)."""
    h2 = hidden_size // 2
    keys = jax.random.split(key, 6)

    def lin(kw, kb, fan_in, fan_out):
        bound = 1.0 / jnp.sqrt(fan_in)
        w = jax.random.uniform(kw, (fan_in, fan_out), jnp.float32, -bound, bound)
        b = jax.random.uniform(kb, (1, fan_out), jnp.float32, -bound, bound)
        return w, b

    w1, b1 = lin(keys[0], keys[1], input_size, hidden_size)
    w2, b2 = lin(keys[2], keys[3], hidden_size, h2)
    w3, b3 = lin(keys[4], keys[5], h2, num_classes)
    return {"w1": w1, "b1": b1, "w2": w2, "b2": b2, "w3": w3, "b3": b3}


def reference_forward_f32(x, p):
    h1 = jnp.maximum(x @ p["w1"] + p["b1"], 0.0)
    h2 = jnp.maximum(h1 @ p["w2"] + p["b2"], 0.0)
    return h2 @ p["w3"] + p["b3"]


def reference_forward_bf16(x, p):
    """Reference matching the kernel's bf16-in / f32-accumulate numerics."""
    bf = jnp.bfloat16
    h1 = jnp.dot(x.astype(bf), p["w1"].astype(bf),
                 preferred_element_type=jnp.float32) + p["b1"]
    h1 = jnp.maximum(h1, 0.0)
    h2 = jnp.dot(h1.astype(bf), p["w2"].astype(bf),
                 preferred_element_type=jnp.float32) + p["b2"]
    h2 = jnp.maximum(h2, 0.0)
    return jnp.dot(h2.astype(bf), p["w3"].astype(bf),
                   preferred_element_type=jnp.float32) + p["b3"]


if __name__ == "__main__":
    # Small shapes consistent with the module.
    batch, input_size, hidden_size, num_classes = 8, 32, 32, 8

    key = jax.random.PRNGKey(0)
    k_x, k_p = jax.random.split(key)
    x = jax.random.normal(k_x, (batch, input_size), jnp.float32)
    params = init_params(k_p, input_size, hidden_size, num_classes)
    fast_params = prepare_params(params)  # one-time bf16 weight cast

    out = emotion_classifier_forward(x, fast_params)
    out = jax.block_until_ready(out)
    assert out.shape == (batch, num_classes)

    # Bit-matched reference (same bf16-in / f32-acc recipe).
    ref_bf16 = reference_forward_bf16(x, params)
    assert jnp.allclose(out, ref_bf16, atol=1e-4, rtol=1e-4), (
        jnp.max(jnp.abs(out - ref_bf16)))

    # Loose sanity check against the pure-f32 PyTorch-equivalent forward.
    ref_f32 = reference_forward_f32(x, params)
    assert jnp.allclose(out, ref_f32, atol=5e-2, rtol=5e-2), (
        jnp.max(jnp.abs(out - ref_f32)))

    print("KERNEL_OK")
</pallas_src>

<mosaic_0001>
module attributes {stable_mosaic.version = 11 : i64} {
  func.func @mlp_kernel(%arg0: i32, %arg1: memref<8x32xf32, #tpu.memory_space<vmem>>, %arg2: memref<32x32xbf16, #tpu.memory_space<vmem>>, %arg3: memref<1x32xf32, #tpu.memory_space<vmem>>, %arg4: memref<32x16xbf16, #tpu.memory_space<vmem>>, %arg5: memref<1x16xf32, #tpu.memory_space<vmem>>, %arg6: memref<16x8xbf16, #tpu.memory_space<vmem>>, %arg7: memref<1x8xf32, #tpu.memory_space<vmem>>, %arg8: memref<8x8xf32, #tpu.memory_space<vmem>>) attributes {dimension_semantics = [#tpu.dimension_semantics<parallel>], iteration_bounds = array<i64: 1>, scalar_prefetch = 0 : i64, scratch_operands = 0 : i64, tpu.core_type = #tpu.core_type<tc>, window_params = [{transform_indices = @transform_0, window_bounds = array<i64: 8, 32>}, {pipeline_mode = #tpu.pipeline_mode<synchronous>, transform_indices = @transform_1, window_bounds = array<i64: 32, 32>}, {pipeline_mode = #tpu.pipeline_mode<synchronous>, transform_indices = @transform_2, window_bounds = array<i64: 1, 32>}, {pipeline_mode = #tpu.pipeline_mode<synchronous>, transform_indices = @transform_3, window_bounds = array<i64: 32, 16>}, {pipeline_mode = #tpu.pipeline_mode<synchronous>, transform_indices = @transform_4, window_bounds = array<i64: 1, 16>}, {pipeline_mode = #tpu.pipeline_mode<synchronous>, transform_indices = @transform_5, window_bounds = array<i64: 16, 8>}, {pipeline_mode = #tpu.pipeline_mode<synchronous>, transform_indices = @transform_6, window_bounds = array<i64: 1, 8>}, {transform_indices = @transform_7, window_bounds = array<i64: 8, 8>}]} {
    %c0 = arith.constant 0 : index
    %c0_0 = arith.constant 0 : index
    %0 = vector.load %arg1[%c0, %c0_0] : memref<8x32xf32, #tpu.memory_space<vmem>>, vector<8x32xf32>
    %1 = arith.truncf %0 : vector<8x32xf32> to vector<8x32xbf16>
    %c0_1 = arith.constant 0 : index
    %c0_2 = arith.constant 0 : index
    %2 = vector.load %arg2[%c0_1, %c0_2] : memref<32x32xbf16, #tpu.memory_space<vmem>>, vector<32x32xbf16>
    %cst = arith.constant dense<0.000000e+00> : vector<8x32xf32>
    %3 = tpu.matmul %1, %2, %cst {dimension_numbers = #tpu.dot_dimension_numbers<[1], [0], [0], [1], [0, 0, 1, 1], [], []>} : vector<8x32xbf16>, vector<32x32xbf16>, vector<8x32xf32> -> vector<8x32xf32>
    %c0_3 = arith.constant 0 : index
    %c0_4 = arith.constant 0 : index
    %4 = vector.load %arg3[%c0_3, %c0_4] : memref<1x32xf32, #tpu.memory_space<vmem>>, vector<1x32xf32>
    %5 = vector.broadcast %4 : vector<1x32xf32> to vector<8x32xf32>
    %6 = arith.addf %3, %5 : vector<8x32xf32>
    %cst_5 = arith.constant 0.000000e+00 : f32
    %7 = vector.broadcast %cst_5 : f32 to vector<8x32xf32>
    %8 = arith.maximumf %6, %7 : vector<8x32xf32>
    %9 = arith.truncf %8 : vector<8x32xf32> to vector<8x32xbf16>
    %c0_6 = arith.constant 0 : index
    %c0_7 = arith.constant 0 : index
    %10 = vector.load %arg4[%c0_6, %c0_7] : memref<32x16xbf16, #tpu.memory_space<vmem>>, vector<32x16xbf16>
    %cst_8 = arith.constant dense<0.000000e+00> : vector<8x16xf32>
    %11 = tpu.matmul %9, %10, %cst_8 {dimension_numbers = #tpu.dot_dimension_numbers<[1], [0], [0], [1], [0, 0, 1, 1], [], []>} : vector<8x32xbf16>, vector<32x16xbf16>, vector<8x16xf32> -> vector<8x16xf32>
    %c0_9 = arith.constant 0 : index
    %c0_10 = arith.constant 0 : index
    %12 = vector.load %arg5[%c0_9, %c0_10] : memref<1x16xf32, #tpu.memory_space<vmem>>, vector<1x16xf32>
    %13 = vector.broadcast %12 : vector<1x16xf32> to vector<8x16xf32>
    %14 = arith.addf %11, %13 : vector<8x16xf32>
    %cst_11 = arith.constant 0.000000e+00 : f32
    %15 = vector.broadcast %cst_11 : f32 to vector<8x16xf32>
    %16 = arith.maximumf %14, %15 : vector<8x16xf32>
    %17 = arith.truncf %16 : vector<8x16xf32> to vector<8x16xbf16>
    %c0_12 = arith.constant 0 : index
    %c0_13 = arith.constant 0 : index
    %18 = vector.load %arg6[%c0_12, %c0_13] : memref<16x8xbf16, #tpu.memory_space<vmem>>, vector<16x8xbf16>
    %cst_14 = arith.constant dense<0.000000e+00> : vector<8x8xf32>
    %19 = tpu.matmul %17, %18, %cst_14 {dimension_numbers = #tpu.dot_dimension_numbers<[1], [0], [0], [1], [0, 0, 1, 1], [], []>} : vector<8x16xbf16>, vector<16x8xbf16>, vector<8x8xf32> -> vector<8x8xf32>
    %c0_15 = arith.constant 0 : index
    %c0_16 = arith.constant 0 : index
    %20 = vector.load %arg7[%c0_15, %c0_16] : memref<1x8xf32, #tpu.memory_space<vmem>>, vector<1x8xf32>
    %21 = vector.broadcast %20 : vector<1x8xf32> to vector<8x8xf32>
    %22 = arith.addf %19, %21 : vector<8x8xf32>
    %c0_17 = arith.constant 0 : index
    %c0_18 = arith.constant 0 : index
    %23 = vector.load %arg8[%c0_17, %c0_18] : memref<8x8xf32, #tpu.memory_space<vmem>>, vector<8x8xf32>
    tpu.vector_store %arg8[%c0_17, %c0_18], %22 {strides = array<i32>} : memref<8x8xf32, #tpu.memory_space<vmem>>, vector<8x8xf32>,
    return
  }
  func.func @transform_0(%arg0: i32) -> (i32, i32) {
    %c0_i32 = arith.constant 0 : i32
    %c0_i32_0 = arith.constant 0 : i32
    return %arg0, %c0_i32 : i32, i32
  }
  func.func @transform_1(%arg0: i32) -> (i32, i32) {
    %c0_i32 = arith.constant 0 : i32
    %c0_i32_0 = arith.constant 0 : i32
    %c0_i32_1 = arith.constant 0 : i32
    return %c0_i32, %c0_i32_0 : i32, i32
  }
  func.func @transform_2(%arg0: i32) -> (i32, i32) {
    %c0_i32 = arith.constant 0 : i32
    %c0_i32_0 = arith.constant 0 : i32
    %c0_i32_1 = arith.constant 0 : i32
    return %c0_i32, %c0_i32_0 : i32, i32
  }
  func.func @transform_3(%arg0: i32) -> (i32, i32) {
    %c0_i32 = arith.constant 0 : i32
    %c0_i32_0 = arith.constant 0 : i32
    %c0_i32_1 = arith.constant 0 : i32
    return %c0_i32, %c0_i32_0 : i32, i32
  }
  func.func @transform_4(%arg0: i32) -> (i32, i32) {
    %c0_i32 = arith.constant 0 : i32
    %c0_i32_0 = arith.constant 0 : i32
    %c0_i32_1 = arith.constant 0 : i32
    return %c0_i32, %c0_i32_0 : i32, i32
  }
  func.func @transform_5(%arg0: i32) -> (i32, i32) {
    %c0_i32 = arith.constant 0 : i32
    %c0_i32_0 = arith.constant 0 : i32
    %c0_i32_1 = arith.constant 0 : i32
    return %c0_i32, %c0_i32_0 : i32, i32
  }
  func.func @transform_6(%arg0: i32) -> (i32, i32) {
    %c0_i32 = arith.constant 0 : i32
    %c0_i32_0 = arith.constant 0 : i32
    %c0_i32_1 = arith.constant 0 : i32
    return %c0_i32, %c0_i32_0 : i32, i32
  }
  func.func @transform_7(%arg0: i32) -> (i32, i32) {
    %c0_i32 = arith.constant 0 : i32
    %c0_i32_0 = arith.constant 0 : i32
    return %arg0, %c0_i32 : i32, i32
  }
}

</mosaic_0001>

<llo_original>
// kernel: emotion_classifier_forward.1
$region0: #{emotion_classifier_forward.1}
  #allocation0 [shape = 'u32[]', space=smem, size = 0x4, offset = 0x4, fixed_abs, tag = 'smem constant byte address 0x4 - core index']
  #allocation1 [shape = 'u32[144,128]{1,0:T(1,128)}', space=vmem, size = 0x12000, scoped, tag = 'internal scratch']
  %s0 = inlined_call_operand.vmem [shape: f32[8,32], index: 0, kind: input, shape index: {}]
  %s1 = inlined_call_operand.vmem [shape: bf16[32,32], index: 1, kind: input, shape index: {}]
  %s2 = inlined_call_operand.vmem [shape: f32[1,32], index: 2, kind: input, shape index: {}]
  %s3 = inlined_call_operand.vmem [shape: bf16[32,16], index: 3, kind: input, shape index: {}]
  %s4 = inlined_call_operand.vmem [shape: f32[1,16], index: 4, kind: input, shape index: {}]
  %s5 = inlined_call_operand.vmem [shape: bf16[16,8], index: 5, kind: input, shape index: {}]
  %s6 = inlined_call_operand.vmem [shape: f32[1,8], index: 6, kind: input, shape index: {}]
  %s7 = inlined_call_operand.hbm [shape: f32[8,8], index: 7, kind: output, shape index: {}]
  %s8 = sld [smem:[#allocation0]]
  $region38: #{emotion_classifier_forward.1} parent=0
    _
  %s10 = ssub.s32 1, %s8
  %s11 = scalar_select 0, %s10, %s8
  $region1: #{emotion_classifier_forward.1} parent=0
    #allocation2 [shape = 'u8[4096]{0}', space=vmem, size = 0x1000, scoped, tag = 'output window, operand 0, single buffered']
    #allocation3 [shape = 's32[1]{0}', space=sflag, size = 0x4, scoped, tag = 'scoped memory for emotion_classifier_forward.1']
    %12 = vsyncpa [#allocation3], 0
    // Predicated region
    $region2: #{emotion_classifier_forward.1} parent=1 // pred_check
      _
    $region3: #{emotion_classifier_forward.1} parent=1 // pred_check_branch
      %14 = sbr.rel (0) target = $region5
    $region4: #{emotion_classifier_forward.1} parent=1 // pred_region
      _
    $region5: #{emotion_classifier_forward.1} parent=1 // pred_fallthru
      _
    // Predicated region
    $region6: #{emotion_classifier_forward.1} parent=1 // pred_check
      _
    $region7: #{emotion_classifier_forward.1} parent=1 // pred_check_branch
      %16 = sbr.rel (0) target = $region9
    $region8: #{emotion_classifier_forward.1} parent=1 // pred_region
      _
    $region9: #{emotion_classifier_forward.1} parent=1 // pred_fallthru
      _
    // Predicated region
    $region10: #{emotion_classifier_forward.1} parent=1 // pred_check
      _
    $region11: #{emotion_classifier_forward.1} parent=1 // pred_check_branch
      %18 = sbr.rel (0) target = $region13
    $region12: #{emotion_classifier_forward.1} parent=1 // pred_region
      _
    $region13: #{emotion_classifier_forward.1} parent=1 // pred_fallthru
      _
    // Predicated region
    $region14: #{emotion_classifier_forward.1} parent=1 // pred_check
      _
    $region15: #{emotion_classifier_forward.1} parent=1 // pred_check_branch
      %20 = sbr.rel (0) target = $region17
    $region16: #{emotion_classifier_forward.1} parent=1 // pred_region
      _
    $region17: #{emotion_classifier_forward.1} parent=1 // pred_fallthru
      _
    // Predicated region
    $region18: #{emotion_classifier_forward.1} parent=1 // pred_check
      _
    $region19: #{emotion_classifier_forward.1} parent=1 // pred_check_branch
      %22 = sbr.rel (0) target = $region21
    $region20: #{emotion_classifier_forward.1} parent=1 // pred_region
      _
    $region21: #{emotion_classifier_forward.1} parent=1 // pred_fallthru
      _
    // Predicated region
    $region22: #{emotion_classifier_forward.1} parent=1 // pred_check
      _
    $region23: #{emotion_classifier_forward.1} parent=1 // pred_check_branch
      %24 = sbr.rel (0) target = $region25
    $region24: #{emotion_classifier_forward.1} parent=1 // pred_region
      _
    $region25: #{emotion_classifier_forward.1} parent=1 // pred_fallthru
      _
    // Predicated region
    $region26: #{emotion_classifier_forward.1} parent=1 // pred_check
      _
    $region27: #{emotion_classifier_forward.1} parent=1 // pred_check_branch
      %26 = sbr.rel (0) target = $region29
    $region28: #{emotion_classifier_forward.1} parent=1 // pred_region
      _
    $region29: #{emotion_classifier_forward.1} parent=1 // pred_fallthru
      _
    %v28 = vld [vmem:[%s0] sm:$0xff]
    %v29 = vpack.c.bf16 %v28, %v28
    %v30 = vld [vmem:[%s1] sm:$0xf]
    %v31 = vld [vmem:[%s1 + $0x4] sm:$0xf]
    %v32 = vld [vmem:[%s1 + $0x8] sm:$0xf]
    %v33 = vld [vmem:[%s1 + $0xc] sm:$0xf]
    %v34 = vld [vmem:[%s2] sm:$0x1]
    %v36 = vlaneseq
    %v37 = vshrl.u32 %v36, 7
    %v38 = vsub.s32 0, %v37
    %v39 = vrot.slane %v34, %v38
    %v45 = vunpack.c.l.b16 %v30
    %v46 = vunpack.c.l.b16 %v31
    %v47 = vunpack.c.l.b16 %v32
    %v48 = vunpack.c.l.b16 %v33
    %v49 = vpack.c.b16 %v46, %v45
    %v50 = vpack.c.b16 %v48, %v47
    %vm53 = vcmask 261120
    %v55 = vsel %vm53, %v29, 0
    %57 = vmatprep.subr.bf16.mxu0 0
    %58 = vmatpush1.bf16.msra.mxu0 0
    %59 = vmatprep.subr.bf16.mxu0 0
    %60 = vmatpush1.bf16.msra.mxu0 0
    %61 = vmatprep.subr.bf16.mxu0 0
    %62 = vmatpush1.bf16.msra.mxu0 0
    %63 = vmatprep.subr.bf16.mxu0 0
    %64 = vmatpush1.bf16.msra.mxu0 0
    %65 = vmatprep.subr.bf16.mxu0 0
    %66 = vmatpush1.bf16.msra.mxu0 0
    %67 = vmatprep.subr.bf16.mxu0 0
    %68 = vmatpush1.bf16.msra.mxu0 0
    %69 = vmatprep.subr.bf16.mxu0 0
    %70 = vmatpush1.bf16.msra.mxu0 %v50
    %71 = vmatprep.subr.bf16.mxu0 0
    %72 = vmatpush1.bf16.msra.mxu0 %v49
    %73 = vmatprep.subr.bf16.mxu0 0
    %74 = vmatpush2.bf16.msra.mxu0 0
    %75 = vmatprep.subr.bf16.mxu0 0
    %76 = vmatpush2.bf16.msra.mxu0 0
    %77 = vmatprep.subr.bf16.mxu0 0
    %78 = vmatpush2.bf16.msra.mxu0 0
    %79 = vmatprep.subr.bf16.mxu0 0
    %80 = vmatpush2.bf16.msra.mxu0 0
    %81 = vmatprep.subr.bf16.mxu0 0
    %82 = vmatpush2.bf16.msra.mxu0 0
    %83 = vmatprep.subr.bf16.mxu0 0
    %84 = vmatpush2.bf16.msra.mxu0 0
    %85 = vmatprep.subr.bf16.mxu0 0
    %86 = vmatpush2.bf16.msra.mxu0 0
    %87 = vmatprep.subr.bf16.mxu0 0
    %88 = vmatpush2.bf16.msra.mxu0 0
    %89 = vmatprep.mubr.bf16.mxu0 0
    %90 = vmatmul.mubr.bf16.gmra.mxu0 %v55
    %v91 = vpop.f32.mrf.mxu0
    %v92 = vadd.f32 %v39, %v91
    %v93 = vpop.f32.mrf.mxu0
    %v94 = vpop.f32.mrf.mxu0
    %v95 = vpop.f32.mrf.mxu0
    %96 = vdwg.mxu0
    %v97 = vmax.f32 %v92, 0.0
    %v98 = vpack.c.bf16 %v97, %v97
    %v99 = vld [vmem:[%s3] sm:$0xf]
    %v100 = vld [vmem:[%s3 + $0x4] sm:$0xf]
    %v101 = vld [vmem:[%s3 + $0x8] sm:$0xf]
    %v102 = vld [vmem:[%s3 + $0xc] sm:$0xf]
    %v103 = vld [vmem:[%s4] sm:$0x1]
    %v105 = vlaneseq
    %v106 = vshrl.u32 %v105, 7
    %v107 = vsub.s32 0, %v106
    %v108 = vrot.slane %v103, %v107
    %v114 = vunpack.c.l.b16 %v99
    %v115 = vunpack.c.l.b16 %v100
    %v116 = vunpack.c.l.b16 %v101
    %v117 = vunpack.c.l.b16 %v102
    %v118 = vpack.c.b16 %v115, %v114
    %v119 = vpack.c.b16 %v117, %v116
    %v123 = vsel %vm53, %v98, 0
    %125 = vmatprep.subr.bf16.mxu0 0
    %126 = vmatpush1.bf16.msra.mxu0 0
    %127 = vmatprep.subr.bf16.mxu0 0
    %128 = vmatpush1.bf16.msra.mxu0 0
    %129 = vmatprep.subr.bf16.mxu0 0
    %130 = vmatpush1.bf16.msra.mxu0 0
    %131 = vmatprep.subr.bf16.mxu0 0
    %132 = vmatpush1.bf16.msra.mxu0 0
    %133 = vmatprep.subr.bf16.mxu0 0
    %134 = vmatpush1.bf16.msra.mxu0 0
    %135 = vmatprep.subr.bf16.mxu0 0
    %136 = vmatpush1.bf16.msra.mxu0 0
    %137 = vmatprep.subr.bf16.mxu0 0
    %138 = vmatpush1.bf16.msra.mxu0 %v119
    %139 = vmatprep.subr.bf16.mxu0 0
    %140 = vmatpush1.bf16.msra.mxu0 %v118
    %141 = vmatprep.subr.bf16.mxu0 0
    %142 = vmatpush2.bf16.msra.mxu0 0
    %143 = vmatprep.subr.bf16.mxu0 0
    %144 = vmatpush2.bf16.msra.mxu0 0
    %145 = vmatprep.subr.bf16.mxu0 0
    %146 = vmatpush2.bf16.msra.mxu0 0
    %147 = vmatprep.subr.bf16.mxu0 0
    %148 = vmatpush2.bf16.msra.mxu0 0
    %149 = vmatprep.subr.bf16.mxu0 0
    %150 = vmatpush2.bf16.msra.mxu0 0
    %151 = vmatprep.subr.bf16.mxu0 0
    %152 = vmatpush2.bf16.msra.mxu0 0
    %153 = vmatprep.subr.bf16.mxu0 0
    %154 = vmatpush2.bf16.msra.mxu0 0
    %155 = vmatprep.subr.bf16.mxu0 0
    %156 = vmatpush2.bf16.msra.mxu0 0
    %157 = vmatprep.mubr.bf16.mxu0 0
    %158 = vmatmul.mubr.bf16.gmra.mxu0 %v123
    %v159 = vpop.f32.mrf.mxu0
    %v160 = vadd.f32 %v108, %v159
    %v161 = vpop.f32.mrf.mxu0
    %v162 = vpop.f32.mrf.mxu0
    %v163 = vpop.f32.mrf.mxu0
    %164 = vdwg.mxu0
    %v165 = vmax.f32 %v160, 0.0
    %v166 = vpack.c.bf16 %v165, %v165
    %v167 = vld [vmem:[%s5] sm:$0xf]
    %v168 = vld [vmem:[%s5 + $0x4] sm:$0xf]
    %v169 = vld [vmem:[%s6] sm:$0x1]
    %v171 = vlaneseq
    %v172 = vshrl.u32 %v171, 7
    %v173 = vsub.s32 0, %v172
    %v174 = vrot.slane %v169, %v173
    %v178 = vunpack.c.l.b16 %v167
    %v179 = vunpack.c.l.b16 %v168
    %v180 = vpack.c.b16 %v179, %v178
    %vm182 = vcmask 130048
    %v184 = vsel %vm182, %v166, 0
    %186 = vmatprep.subr.bf16.mxu0 0
    %187 = vmatpush1.bf16.msra.mxu0 0
    %188 = vmatprep.subr.bf16.mxu0 0
    %189 = vmatpush1.bf16.msra.mxu0 0
    %190 = vmatprep.subr.bf16.mxu0 0
    %191 = vmatpush1.bf16.msra.mxu0 0
    %192 = vmatprep.subr.bf16.mxu0 0
    %193 = vmatpush1.bf16.msra.mxu0 0
    %194 = vmatprep.subr.bf16.mxu0 0
    %195 = vmatpush1.bf16.msra.mxu0 0
    %196 = vmatprep.subr.bf16.mxu0 0
    %197 = vmatpush1.bf16.msra.mxu0 0
    %198 = vmatprep.subr.bf16.mxu0 0
    %199 = vmatpush1.bf16.msra.mxu0 0
    %200 = vmatprep.subr.bf16.mxu0 0
    %201 = vmatpush1.bf16.msra.mxu0 %v180
    %202 = vmatprep.subr.bf16.mxu0 0
    %203 = vmatpush2.bf16.msra.mxu0 0
    %204 = vmatprep.subr.bf16.mxu0 0
    %205 = vmatpush2.bf16.msra.mxu0 0
    %206 = vmatprep.subr.bf16.mxu0 0
    %207 = vmatpush2.bf16.msra.mxu0 0
    %208 = vmatprep.subr.bf16.mxu0 0
    %209 = vmatpush2.bf16.msra.mxu0 0
    %210 = vmatprep.subr.bf16.mxu0 0
    %211 = vmatpush2.bf16.msra.mxu0 0
    %212 = vmatprep.subr.bf16.mxu0 0
    %213 = vmatpush2.bf16.msra.mxu0 0
    %214 = vmatprep.subr.bf16.mxu0 0
    %215 = vmatpush2.bf16.msra.mxu0 0
    %216 = vmatprep.subr.bf16.mxu0 0
    %217 = vmatpush2.bf16.msra.mxu0 0
    %218 = vmatprep.mubr.bf16.mxu0 0
    %219 = vmatmul.mubr.bf16.gmra.mxu0 %v184
    %v220 = vpop.f32.mrf.mxu0
    %v221 = vadd.f32 %v174, %v220
    %v222 = vpop.f32.mrf.mxu0
    %v223 = vpop.f32.mrf.mxu0
    %v224 = vpop.f32.mrf.mxu0
    %225 = vdwg.mxu0
    %vm226 = vcmask 64512
    %227 = vst.msk [vmem:[#allocation2] sm:$0xff] %vm226, %v221
    // Predicated region
    $region30: #{emotion_classifier_forward.1} parent=1 // pred_check
      _
    $region31: #{emotion_classifier_forward.1} parent=1 // pred_check_branch
      %229 = sbr.rel (0) target = $region33
    $region32: #{emotion_classifier_forward.1} parent=1 // pred_region
      %s231 = ssub.s32 128, 128
      %232 = vsyncadd [#allocation3], %s231
      %s234 = sshll.u32 [#allocation2], 4
      %s235 = int_to_ptr.vmem [resolvable:$true] %s234
      %237 = dma.vmem_to_hbm [thread:$0]  %s235, 128, %s7, [#allocation3]
    $region33: #{emotion_classifier_forward.1} parent=1 // pred_fallthru
      _
    // Predicated region
    $region34: #{emotion_classifier_forward.1} parent=1 // pred_check
      _
    $region35: #{emotion_classifier_forward.1} parent=1 // pred_check_branch
      %239 = sbr.rel (0) target = $region37
    $region36: #{emotion_classifier_forward.1} parent=1 // pred_region
      %240 = dma.done [#allocation3], 128
    $region37: #{emotion_classifier_forward.1} parent=1 // pred_fallthru
      _
    %241 = vsyncpa [#allocation3], 1

</llo_original>
